<compile_context>
chip_gen: v7x
topology: tpu7x:2x2x1
jax: 0.10.0
libtpu: 0.0.40
codegen_flags: <defaults>
</compile_context>

<pallas_src>
import jax
import jax.numpy as jnp
from jax.experimental import pallas as pl
from jax.experimental.pallas import tpu as pltpu

LANE = 128  # lane width: output-facing feature dim padded to this


def _pernet_fused_kernel(x_ref, adj_ref, adj2_ref, wa_ref, ba_ref, wb_ref,
                         bb_ref, o_ref):
    """Fused: relu(adj @ (x@Wa) + ba) -> adj^2 @ (h@Wb) + bb (bf16 MXU, f32 acc)."""
    x = x_ref[...].astype(jnp.bfloat16)   # per-call input: cast in-kernel (VPU, free)
    adj = adj_ref[...]                    # bf16, loaded once
    adj2 = adj2_ref[...]                  # bf16, precomputed adj @ adj
    ba = ba_ref[...]                      # f32 biases, hoisted loads
    bb = bb_ref[...]

    # ---- layer A: nfeat -> nhid, queues=1, ReLU ----
    h = jnp.dot(x, wa_ref[...], preferred_element_type=jnp.float32)
    h = jnp.dot(adj, h.astype(jnp.bfloat16), preferred_element_type=jnp.float32)
    h = jnp.maximum(h + ba, 0.0)

    # ---- layer B: nhid -> nclass, queues=2 (folded into adj2), identity ----
    h = jnp.dot(h.astype(jnp.bfloat16), wb_ref[...],
                preferred_element_type=jnp.float32)
    h = jnp.dot(adj2, h.astype(jnp.bfloat16), preferred_element_type=jnp.float32)
    o_ref[...] = (h + bb).astype(o_ref.dtype)


def _pad_cols(a, cols):
    return jnp.pad(a, ((0, 0), (0, cols - a.shape[1])))


def prepare_pernet_inputs(params, adj):
    """One-time preprocessing hoisted out of the per-call path.

    - precompute adj^2 (adj is constant across forwards) in f32
    - pad ONLY the output-facing dims (wb / bb cols -> 128 lanes)
    - cast all MXU operands to bf16
    """
    adj = jnp.asarray(adj, jnp.float32)
    adj2 = adj @ adj
    return {
        "adj": adj.astype(jnp.bfloat16),
        "adj2": adj2.astype(jnp.bfloat16),
        "wa": params["wa"].astype(jnp.bfloat16),          # (nfeat, nhid)
        "ba": params["ba"].astype(jnp.float32),           # (1, nhid)
        "wb": _pad_cols(params["wb"], LANE).astype(jnp.bfloat16),  # (nhid, 128)
        "bb": _pad_cols(params["bb"], LANE).astype(jnp.float32),   # (1, 128)
    }


@jax.jit
def pernet_forward_padded(x, prep):
    """Per-call path: exactly one pallas_call. Returns padded (N, 128) f32;
    the valid result lives in out[:, :nclass]."""
    n = x.shape[0]
    vmem = lambda: pl.BlockSpec(memory_space=pltpu.MemorySpace.VMEM)
    return pl.pallas_call(
        _pernet_fused_kernel,
        out_shape=jax.ShapeDtypeStruct((n, LANE), jnp.float32),
        in_specs=[vmem() for _ in range(7)],
        out_specs=vmem(),
    )(x, prep["adj"], prep["adj2"], prep["wa"], prep["ba"], prep["wb"],
      prep["bb"])


def init_pernet_params(key, nfeat, nhid, nclass):
    k1, k2, k3, k4 = jax.random.split(key, 4)

    def glorot(k, fan_in, fan_out):
        limit = (6.0 / (fan_in + fan_out)) ** 0.5
        return jax.random.uniform(
            k, (fan_in, fan_out), jnp.float32, minval=-limit, maxval=limit
        )

    return {
        "wa": glorot(k1, nfeat, nhid),
        "ba": 0.01 * jax.random.normal(k2, (1, nhid), jnp.float32),
        "wb": glorot(k3, nhid, nclass),
        "bb": 0.01 * jax.random.normal(k4, (1, nclass), jnp.float32),
    }


if __name__ == "__main__":
    key = jax.random.PRNGKey(0)
    k_x, k_adj, k_p = jax.random.split(key, 3)

    N = 16      # number of nodes
    NFEAT = 8
    NHID = 32   # fixed by PerNet.__init__ (hidden = 32)
    NCLASS = 4

    x = jax.random.normal(k_x, (N, NFEAT), jnp.float32)

    # Symmetric, row-normalized adjacency with self-loops (typical GCN input).
    a = jax.random.uniform(k_adj, (N, N), jnp.float32)
    a = (a + a.T) * 0.5 + jnp.eye(N, dtype=jnp.float32)
    adj = a / jnp.sum(a, axis=1, keepdims=True)

    params = init_pernet_params(k_p, NFEAT, NHID, NCLASS)

    # One-time preprocessing (pad / cast / adj^2) — NOT in the hot path.
    prep = prepare_pernet_inputs(params, adj)

    out_p = pernet_forward_padded(x, prep)
    out_p = jax.block_until_ready(out_p)

    # Consumer-side view into the padded buffer (test harness only).
    out = out_p[:N, :NCLASS]

    # Pure-JAX f32 reference of the original module math; kernel uses bf16 MXU
    # operands with f32 accumulation, so tolerance is loosened accordingly.
    ref1 = jnp.maximum(adj @ (x @ params["wa"]) + params["ba"], 0.0)
    ref2 = adj @ (adj @ (ref1 @ params["wb"])) + params["bb"]
    assert out.shape == (N, NCLASS)
    max_err = jnp.max(jnp.abs(out - ref2))
    assert jnp.allclose(out, ref2, atol=5e-2, rtol=5e-2), f"max abs err {max_err}"

    print("KERNEL_OK")
</pallas_src>

<mosaic_0001>
module attributes {stable_mosaic.version = 11 : i64} {
  func.func @_pernet_fused_kernel(%arg0: memref<16x8xf32, #tpu.memory_space<vmem>>, %arg1: memref<16x16xbf16, #tpu.memory_space<vmem>>, %arg2: memref<16x16xbf16, #tpu.memory_space<vmem>>, %arg3: memref<8x32xbf16, #tpu.memory_space<vmem>>, %arg4: memref<1x32xf32, #tpu.memory_space<vmem>>, %arg5: memref<32x128xbf16, #tpu.memory_space<vmem>>, %arg6: memref<1x128xf32, #tpu.memory_space<vmem>>, %arg7: memref<16x128xf32, #tpu.memory_space<vmem>>) attributes {dimension_semantics = [], scalar_prefetch = 0 : i64, scratch_operands = 0 : i64, tpu.core_type = #tpu.core_type<tc>} {
    %c0 = arith.constant 0 : index
    %c0_0 = arith.constant 0 : index
    %0 = vector.load %arg0[%c0, %c0_0] : memref<16x8xf32, #tpu.memory_space<vmem>>, vector<16x8xf32>
    %1 = arith.truncf %0 : vector<16x8xf32> to vector<16x8xbf16>
    %c0_1 = arith.constant 0 : index
    %c0_2 = arith.constant 0 : index
    %2 = vector.load %arg1[%c0_1, %c0_2] : memref<16x16xbf16, #tpu.memory_space<vmem>>, vector<16x16xbf16>
    %c0_3 = arith.constant 0 : index
    %c0_4 = arith.constant 0 : index
    %3 = vector.load %arg2[%c0_3, %c0_4] : memref<16x16xbf16, #tpu.memory_space<vmem>>, vector<16x16xbf16>
    %c0_5 = arith.constant 0 : index
    %c0_6 = arith.constant 0 : index
    %4 = vector.load %arg4[%c0_5, %c0_6] : memref<1x32xf32, #tpu.memory_space<vmem>>, vector<1x32xf32>
    %c0_7 = arith.constant 0 : index
    %c0_8 = arith.constant 0 : index
    %5 = vector.load %arg6[%c0_7, %c0_8] : memref<1x128xf32, #tpu.memory_space<vmem>>, vector<1x128xf32>
    %c0_9 = arith.constant 0 : index
    %c0_10 = arith.constant 0 : index
    %6 = vector.load %arg3[%c0_9, %c0_10] : memref<8x32xbf16, #tpu.memory_space<vmem>>, vector<8x32xbf16>
    %cst = arith.constant dense<0.000000e+00> : vector<16x32xf32>
    %7 = tpu.matmul %1, %6, %cst {dimension_numbers = #tpu.dot_dimension_numbers<[1], [0], [0], [1], [0, 0, 1, 1], [], []>} : vector<16x8xbf16>, vector<8x32xbf16>, vector<16x32xf32> -> vector<16x32xf32>
    %8 = arith.truncf %7 : vector<16x32xf32> to vector<16x32xbf16>
    %cst_11 = arith.constant dense<0.000000e+00> : vector<16x32xf32>
    %9 = tpu.matmul %2, %8, %cst_11 {dimension_numbers = #tpu.dot_dimension_numbers<[1], [0], [0], [1], [0, 0, 1, 1], [], []>} : vector<16x16xbf16>, vector<16x32xbf16>, vector<16x32xf32> -> vector<16x32xf32>
    %10 = vector.broadcast %4 : vector<1x32xf32> to vector<16x32xf32>
    %11 = arith.addf %9, %10 : vector<16x32xf32>
    %cst_12 = arith.constant 0.000000e+00 : f32
    %12 = vector.broadcast %cst_12 : f32 to vector<16x32xf32>
    %13 = arith.maximumf %11, %12 : vector<16x32xf32>
    %14 = arith.truncf %13 : vector<16x32xf32> to vector<16x32xbf16>
    %c0_13 = arith.constant 0 : index
    %c0_14 = arith.constant 0 : index
    %15 = vector.load %arg5[%c0_13, %c0_14] : memref<32x128xbf16, #tpu.memory_space<vmem>>, vector<32x128xbf16>
    %cst_15 = arith.constant dense<0.000000e+00> : vector<16x128xf32>
    %16 = tpu.matmul %14, %15, %cst_15 {dimension_numbers = #tpu.dot_dimension_numbers<[1], [0], [0], [1], [0, 0, 1, 1], [], []>} : vector<16x32xbf16>, vector<32x128xbf16>, vector<16x128xf32> -> vector<16x128xf32>
    %17 = arith.truncf %16 : vector<16x128xf32> to vector<16x128xbf16>
    %cst_16 = arith.constant dense<0.000000e+00> : vector<16x128xf32>
    %18 = tpu.matmul %3, %17, %cst_16 {dimension_numbers = #tpu.dot_dimension_numbers<[1], [0], [0], [1], [0, 0, 1, 1], [], []>} : vector<16x16xbf16>, vector<16x128xbf16>, vector<16x128xf32> -> vector<16x128xf32>
    %19 = vector.broadcast %5 : vector<1x128xf32> to vector<16x128xf32>
    %20 = arith.addf %18, %19 : vector<16x128xf32>
    %c0_17 = arith.constant 0 : index
    %c0_18 = arith.constant 0 : index
    %21 = vector.load %arg7[%c0_17, %c0_18] : memref<16x128xf32, #tpu.memory_space<vmem>>, vector<16x128xf32>
    tpu.vector_store %arg7[%c0_17, %c0_18], %20 {strides = array<i32>} : memref<16x128xf32, #tpu.memory_space<vmem>>, vector<16x128xf32>,
    return
  }
}

</mosaic_0001>

<llo_original>
// kernel: pernet_forward_padded.1
$region0: #{pernet_forward_padded.1}
  #allocation0 [shape = 'u32[]', space=smem, size = 0x4, offset = 0x4, fixed_abs, tag = 'smem constant byte address 0x4 - core index']
  #allocation1 [shape = 'u32[144,128]{1,0:T(1,128)}', space=vmem, size = 0x12000, scoped, tag = 'internal scratch']
  %s0 = inlined_call_operand.vmem [shape: f32[16,8], index: 0, kind: input, shape index: {}]
  %s1 = inlined_call_operand.vmem [shape: bf16[16,16], index: 1, kind: input, shape index: {}]
  %s2 = inlined_call_operand.hbm [shape: bf16[16,16], index: 2, kind: input, shape index: {}]
  %s3 = inlined_call_operand.vmem [shape: bf16[8,32], index: 3, kind: input, shape index: {}]
  %s4 = inlined_call_operand.vmem [shape: f32[1,32], index: 4, kind: input, shape index: {}]
  %s5 = inlined_call_operand.vmem [shape: bf16[32,128], index: 5, kind: input, shape index: {}]
  %s6 = inlined_call_operand.vmem [shape: f32[1,128], index: 6, kind: input, shape index: {}]
  %s7 = inlined_call_operand.hbm [shape: f32[16,128], index: 7, kind: output, shape index: {}]
  %s8 = sld [smem:[#allocation0]]
  $region42: #{pernet_forward_padded.1} parent=0
    _
  %s10 = ssub.s32 1, %s8
  %s11 = scalar_select 0, %s10, %s8
  $region1: #{pernet_forward_padded.1} parent=0
    #allocation2 [shape = 'u8[4096]{0}', space=vmem, size = 0x1000, scoped, tag = 'input window, operand 2, single buffered']
    #allocation3 [shape = 's32[1]{0}', space=sflag, size = 0x4, scoped, tag = 'scoped memory for pernet_forward_padded.1']
    #allocation4 [shape = 's32[1]{0}', space=sflag, size = 0x4, scoped, tag = 'scoped memory for pernet_forward_padded.1']
    #allocation5 [shape = 'u8[8192]{0}', space=vmem, size = 0x2000, scoped, tag = 'output window, operand 0, single buffered']
    %12 = vsyncpa [#allocation3], 0
    %13 = vsyncpa [#allocation4], 0
    // Predicated region
    $region2: #{pernet_forward_padded.1} parent=1 // pred_check
      _
    $region3: #{pernet_forward_padded.1} parent=1 // pred_check_branch
      %15 = sbr.rel (0) target = $region5
    $region4: #{pernet_forward_padded.1} parent=1 // pred_region
      _
    $region5: #{pernet_forward_padded.1} parent=1 // pred_fallthru
      _
    // Predicated region
    $region6: #{pernet_forward_padded.1} parent=1 // pred_check
      _
    $region7: #{pernet_forward_padded.1} parent=1 // pred_check_branch
      %17 = sbr.rel (0) target = $region9
    $region8: #{pernet_forward_padded.1} parent=1 // pred_region
      _
    $region9: #{pernet_forward_padded.1} parent=1 // pred_fallthru
      _
    // Predicated region
    $region10: #{pernet_forward_padded.1} parent=1 // pred_check
      _
    $region11: #{pernet_forward_padded.1} parent=1 // pred_check_branch
      %19 = sbr.rel (0) target = $region13
    $region12: #{pernet_forward_padded.1} parent=1 // pred_region
      %s21 = ssub.s32 128, 128
      %22 = vsyncadd [#allocation3], %s21
      %s23 = sshll.u32 [#allocation2], 4
      %s24 = int_to_ptr.vmem [resolvable:$true] %s23
      %29 = dma.hbm_to_vmem [thread:$0]  %s2, 128, %s24, [#allocation3], 64, 64, 4
    $region13: #{pernet_forward_padded.1} parent=1 // pred_fallthru
      _
    // Predicated region
    $region14: #{pernet_forward_padded.1} parent=1 // pred_check
      _
    $region15: #{pernet_forward_padded.1} parent=1 // pred_check_branch
      %31 = sbr.rel (0) target = $region17
    $region16: #{pernet_forward_padded.1} parent=1 // pred_region
      _
    $region17: #{pernet_forward_padded.1} parent=1 // pred_fallthru
      _
    // Predicated region
    $region18: #{pernet_forward_padded.1} parent=1 // pred_check
      _
    $region19: #{pernet_forward_padded.1} parent=1 // pred_check_branch
      %33 = sbr.rel (0) target = $region21
    $region20: #{pernet_forward_padded.1} parent=1 // pred_region
      _
    $region21: #{pernet_forward_padded.1} parent=1 // pred_fallthru
      _
    // Predicated region
    $region22: #{pernet_forward_padded.1} parent=1 // pred_check
      _
    $region23: #{pernet_forward_padded.1} parent=1 // pred_check_branch
      %35 = sbr.rel (0) target = $region25
    $region24: #{pernet_forward_padded.1} parent=1 // pred_region
      _
    $region25: #{pernet_forward_padded.1} parent=1 // pred_fallthru
      _
    // Predicated region
    $region26: #{pernet_forward_padded.1} parent=1 // pred_check
      _
    $region27: #{pernet_forward_padded.1} parent=1 // pred_check_branch
      %37 = sbr.rel (0) target = $region29
    $region28: #{pernet_forward_padded.1} parent=1 // pred_region
      _
    $region29: #{pernet_forward_padded.1} parent=1 // pred_fallthru
      _
    // Predicated region
    $region30: #{pernet_forward_padded.1} parent=1 // pred_check
      _
    $region31: #{pernet_forward_padded.1} parent=1 // pred_check_branch
      %39 = sbr.rel (0) target = $region33
    $region32: #{pernet_forward_padded.1} parent=1 // pred_region
      %40 = dma.done [#allocation3], 128
    $region33: #{pernet_forward_padded.1} parent=1 // pred_fallthru
      _
    %v42 = vld [vmem:[%s0] sm:$0xff]
    %v43 = vld [vmem:[%s0 + $0x8] sm:$0xff]
    %v44 = vpack.c.bf16 %v43, %v42
    %v45 = vld [vmem:[%s1] sm:$0xf]
    %v46 = vld [vmem:[%s1 + $0x4] sm:$0xf]
    %v47 = vld [vmem:[#allocation2] sm:$0xf]
    %v48 = vld [vmem:[#allocation2 + $0x4] sm:$0xf]
    %v49 = vld [vmem:[%s4] sm:$0x1]
    %v50 = vld [vmem:[%s6] sm:$0x1]
    %v51 = vld [vmem:[%s3] sm:$0xf]
    %vm52 = vcmask 64512
    %v54 = vsel %vm52, %v44, 0
    %vm56 = vcmask 1043456
    %v58 = vsel %vm56, %v51, 0
    %60 = vmatprep.subr.bf16.mxu0 0
    %61 = vmatpush1.bf16.msra.mxu0 %v58
    %62 = vmatprep.subr.bf16.mxu0 0
    %63 = vmatpush1.bf16.msra.mxu0 0
    %64 = vmatprep.subr.bf16.mxu0 0
    %65 = vmatpush1.bf16.msra.mxu0 0
    %66 = vmatprep.subr.bf16.mxu0 0
    %67 = vmatpush1.bf16.msra.mxu0 0
    %68 = vmatprep.subr.bf16.mxu0 0
    %69 = vmatpush1.bf16.msra.mxu0 0
    %70 = vmatprep.subr.bf16.mxu0 0
    %71 = vmatpush1.bf16.msra.mxu0 0
    %72 = vmatprep.subr.bf16.mxu0 0
    %73 = vmatpush1.bf16.msra.mxu0 0
    %74 = vmatprep.subr.bf16.mxu0 0
    %75 = vmatpush1.bf16.msra.mxu0 0
    %76 = vmatprep.subr.bf16.mxu0 0
    %77 = vmatpush1.bf16.msra.mxu0 0
    %78 = vmatprep.subr.bf16.mxu0 0
    %79 = vmatpush1.bf16.msra.mxu0 0
    %80 = vmatprep.subr.bf16.mxu0 0
    %81 = vmatpush1.bf16.msra.mxu0 0
    %82 = vmatprep.subr.bf16.mxu0 0
    %83 = vmatpush1.bf16.msra.mxu0 0
    %84 = vmatprep.subr.bf16.mxu0 0
    %85 = vmatpush1.bf16.msra.mxu0 0
    %86 = vmatprep.subr.bf16.mxu0 0
    %87 = vmatpush1.bf16.msra.mxu0 0
    %88 = vmatprep.subr.bf16.mxu0 0
    %89 = vmatpush1.bf16.msra.mxu0 0
    %90 = vmatprep.subr.bf16.mxu0 0
    %91 = vmatpush1.bf16.msra.mxu0 0
    %92 = vmatprep.mubr.bf16.mxu0 0
    %93 = vmatmul.mubr.bf16.gmra.mrb[0].mxu0 %v54
    %v94 = vpop.f32.mrb[0].mxu0
    %v95 = vadd.f32 0.0, %v94
    %v96 = vpop.f32.mrb[0].mxu0
    %v97 = vpop.f32.mrb[0].mxu0
    %v98 = vadd.f32 0.0, %v97
    %v99 = vpop.f32.mrb[0].mxu0
    %100 = vdwg.mxu0
    %v101 = vpack.c.bf16 %v98, %v95
    %v103 = vlaneseq
    %v104 = vshrl.u32 %v103, 7
    %v105 = vsub.s32 0, %v104
    %v106 = vrot.slane %v49, %v105
    %v110 = vunpack.c.l.b16 %v45
    %v111 = vunpack.c.l.b16 %v46
    %v112 = vpack.c.b16 %v111, %v110
    %vm113 = vcmask 130048
    %v115 = vsel %vm113, %v112, 0
    %117 = vmatprep.subr.bf16.mxu0 0
    %118 = vmatpush1.bf16.msra.mxu0 %v101
    %119 = vmatprep.subr.bf16.mxu0 0
    %120 = vmatpush1.bf16.msra.mxu0 0
    %121 = vmatprep.subr.bf16.mxu0 0
    %122 = vmatpush1.bf16.msra.mxu0 0
    %123 = vmatprep.subr.bf16.mxu0 0
    %124 = vmatpush1.bf16.msra.mxu0 0
    %125 = vmatprep.subr.bf16.mxu0 0
    %126 = vmatpush1.bf16.msra.mxu0 0
    %127 = vmatprep.subr.bf16.mxu0 0
    %128 = vmatpush1.bf16.msra.mxu0 0
    %129 = vmatprep.subr.bf16.mxu0 0
    %130 = vmatpush1.bf16.msra.mxu0 0
    %131 = vmatprep.subr.bf16.mxu0 0
    %132 = vmatpush1.bf16.msra.mxu0 0
    %133 = vmatprep.subr.bf16.mxu0 0
    %134 = vmatpush1.bf16.msra.mxu0 0
    %135 = vmatprep.subr.bf16.mxu0 0
    %136 = vmatpush1.bf16.msra.mxu0 0
    %137 = vmatprep.subr.bf16.mxu0 0
    %138 = vmatpush1.bf16.msra.mxu0 0
    %139 = vmatprep.subr.bf16.mxu0 0
    %140 = vmatpush1.bf16.msra.mxu0 0
    %141 = vmatprep.subr.bf16.mxu0 0
    %142 = vmatpush1.bf16.msra.mxu0 0
    %143 = vmatprep.subr.bf16.mxu0 0
    %144 = vmatpush1.bf16.msra.mxu0 0
    %145 = vmatprep.subr.bf16.mxu0 0
    %146 = vmatpush1.bf16.msra.mxu0 0
    %147 = vmatprep.subr.bf16.mxu0 0
    %148 = vmatpush1.bf16.msra.mxu0 0
    %149 = vmatprep.mubr.bf16.mxu0 0
    %150 = vmatmul.mubr.bf16.gmra.mrb[0].mxu0 %v115
    %v151 = vpop.f32.mrb[0].mxu0
    %v152 = vadd.f32 %v106, %v151
    %v153 = vpop.f32.mrb[0].mxu0
    %v154 = vpop.f32.mrb[0].mxu0
    %v155 = vadd.f32 %v106, %v154
    %v156 = vpop.f32.mrb[0].mxu0
    %157 = vdwg.mxu0
    %v158 = vmax.f32 %v152, 0.0
    %v159 = vmax.f32 %v155, 0.0
    %v160 = vpack.c.bf16 %v159, %v158
    %v161 = vld [vmem:[%s5] sm:$0xf]
    %v162 = vld [vmem:[%s5 + $0x4] sm:$0xf]
    %v163 = vld [vmem:[%s5 + $0x8] sm:$0xf]
    %v164 = vld [vmem:[%s5 + $0xc] sm:$0xf]
    %v169 = vunpack.c.l.b16 %v161
    %v170 = vunpack.c.l.b16 %v162
    %v171 = vunpack.c.l.b16 %v163
    %v172 = vunpack.c.l.b16 %v164
    %v173 = vpack.c.b16 %v170, %v169
    %v174 = vpack.c.b16 %v172, %v171
    %vm177 = vcmask 261120
    %v179 = vsel %vm177, %v160, 0
    %181 = vmatprep.subr.bf16.mxu0 0
    %182 = vmatpush1.bf16.msra.mxu0 %v173
    %183 = vmatprep.subr.bf16.mxu0 0
    %184 = vmatpush1.bf16.msra.mxu0 %v174
    %185 = vmatprep.subr.bf16.mxu0 0
    %186 = vmatpush1.bf16.msra.mxu0 0
    %187 = vmatprep.subr.bf16.mxu0 0
    %188 = vmatpush1.bf16.msra.mxu0 0
    %189 = vmatprep.subr.bf16.mxu0 0
    %190 = vmatpush1.bf16.msra.mxu0 0
    %191 = vmatprep.subr.bf16.mxu0 0
    %192 = vmatpush1.bf16.msra.mxu0 0
    %193 = vmatprep.subr.bf16.mxu0 0
    %194 = vmatpush1.bf16.msra.mxu0 0
    %195 = vmatprep.subr.bf16.mxu0 0
    %196 = vmatpush1.bf16.msra.mxu0 0
    %197 = vmatprep.subr.bf16.mxu0 0
    %198 = vmatpush1.bf16.msra.mxu0 0
    %199 = vmatprep.subr.bf16.mxu0 0
    %200 = vmatpush1.bf16.msra.mxu0 0
    %201 = vmatprep.subr.bf16.mxu0 0
    %202 = vmatpush1.bf16.msra.mxu0 0
    %203 = vmatprep.subr.bf16.mxu0 0
    %204 = vmatpush1.bf16.msra.mxu0 0
    %205 = vmatprep.subr.bf16.mxu0 0
    %206 = vmatpush1.bf16.msra.mxu0 0
    %207 = vmatprep.subr.bf16.mxu0 0
    %208 = vmatpush1.bf16.msra.mxu0 0
    %209 = vmatprep.subr.bf16.mxu0 0
    %210 = vmatpush1.bf16.msra.mxu0 0
    %211 = vmatprep.subr.bf16.mxu0 0
    %212 = vmatpush1.bf16.msra.mxu0 0
    %213 = vmatprep.mubr.bf16.mxu0 0
    %214 = vmatmul.mubr.bf16.gmra.mrb[0].mxu0 %v179
    %v215 = vpop.f32.mrb[0].mxu0
    %v216 = vadd.f32 0.0, %v215
    %v217 = vpop.f32.mrb[0].mxu0
    %v218 = vpop.f32.mrb[0].mxu0
    %v219 = vadd.f32 0.0, %v218
    %v220 = vpop.f32.mrb[0].mxu0
    %221 = vdwg.mxu0
    %v222 = vpack.c.bf16 %v219, %v216
    %v224 = vlaneseq
    %v225 = vshrl.u32 %v224, 7
    %v226 = vsub.s32 0, %v225
    %v227 = vrot.slane %v50, %v226
    %v231 = vunpack.c.l.b16 %v47
    %v232 = vunpack.c.l.b16 %v48
    %v233 = vpack.c.b16 %v232, %v231
    %v235 = vsel %vm113, %v233, 0
    %237 = vmatprep.subr.bf16.mxu0 0
    %238 = vmatpush1.bf16.msra.mxu0 %v222
    %239 = vmatprep.subr.bf16.mxu0 0
    %240 = vmatpush1.bf16.msra.mxu0 0
    %241 = vmatprep.subr.bf16.mxu0 0
    %242 = vmatpush1.bf16.msra.mxu0 0
    %243 = vmatprep.subr.bf16.mxu0 0
    %244 = vmatpush1.bf16.msra.mxu0 0
    %245 = vmatprep.subr.bf16.mxu0 0
    %246 = vmatpush1.bf16.msra.mxu0 0
    %247 = vmatprep.subr.bf16.mxu0 0
    %248 = vmatpush1.bf16.msra.mxu0 0
    %249 = vmatprep.subr.bf16.mxu0 0
    %250 = vmatpush1.bf16.msra.mxu0 0
    %251 = vmatprep.subr.bf16.mxu0 0
    %252 = vmatpush1.bf16.msra.mxu0 0
    %253 = vmatprep.subr.bf16.mxu0 0
    %254 = vmatpush1.bf16.msra.mxu0 0
    %255 = vmatprep.subr.bf16.mxu0 0
    %256 = vmatpush1.bf16.msra.mxu0 0
    %257 = vmatprep.subr.bf16.mxu0 0
    %258 = vmatpush1.bf16.msra.mxu0 0
    %259 = vmatprep.subr.bf16.mxu0 0
    %260 = vmatpush1.bf16.msra.mxu0 0
    %261 = vmatprep.subr.bf16.mxu0 0
    %262 = vmatpush1.bf16.msra.mxu0 0
    %263 = vmatprep.subr.bf16.mxu0 0
    %264 = vmatpush1.bf16.msra.mxu0 0
    %265 = vmatprep.subr.bf16.mxu0 0
    %266 = vmatpush1.bf16.msra.mxu0 0
    %267 = vmatprep.subr.bf16.mxu0 0
    %268 = vmatpush1.bf16.msra.mxu0 0
    %269 = vmatprep.mubr.bf16.mxu0 0
    %270 = vmatmul.mubr.bf16.gmra.mrb[0].mxu0 %v235
    %v271 = vpop.f32.mrb[0].mxu0
    %v272 = vadd.f32 %v227, %v271
    %v273 = vpop.f32.mrb[0].mxu0
    %v274 = vpop.f32.mrb[0].mxu0
    %v275 = vadd.f32 %v227, %v274
    %v276 = vpop.f32.mrb[0].mxu0
    %277 = vdwg.mxu0
    %278 = vst [vmem:[#allocation5] sm:$0xff] %v272
    %279 = vst [vmem:[#allocation5 + $0x8] sm:$0xff] %v275
    // Predicated region
    $region34: #{pernet_forward_padded.1} parent=1 // pred_check
      _
    $region35: #{pernet_forward_padded.1} parent=1 // pred_check_branch
      %281 = sbr.rel (0) target = $region37
    $region36: #{pernet_forward_padded.1} parent=1 // pred_region
      %s283 = ssub.s32 256, 256
      %284 = vsyncadd [#allocation4], %s283
      %s285 = sshll.u32 [#allocation5], 4
      %s286 = int_to_ptr.vmem [resolvable:$true] %s285
      %291 = dma.vmem_to_hbm [thread:$0]  %s286, 256, %s7, [#allocation4], 128, 128, 8
    $region37: #{pernet_forward_padded.1} parent=1 // pred_fallthru
      _
    // Predicated region
    $region38: #{pernet_forward_padded.1} parent=1 // pred_check
      _
    $region39: #{pernet_forward_padded.1} parent=1 // pred_check_branch
      %293 = sbr.rel (0) target = $region41
    $region40: #{pernet_forward_padded.1} parent=1 // pred_region
      %294 = dma.done [#allocation4], 256
    $region41: #{pernet_forward_padded.1} parent=1 // pred_fallthru
      _
    %295 = vsyncpa [#allocation3], 1
    %296 = vsyncpa [#allocation4], 1

</llo_original>
